<compile_context>
chip_gen: v5e
topology: v5e:2x2
jax: 0.10.0
libtpu: 0.0.40
codegen_flags: <defaults>
</compile_context>

<pallas_src>
import math

import jax
import jax.numpy as jnp
from jax.experimental import pallas as pl
from jax.experimental.pallas import tpu as pltpu


# ----------------------------- kernels --------------------------------------

def _gcn_layer1_kernel(a_ref, x_ref, w1_ref, b1_ref, w2_ref, g_ref, acc_ref):
    # a_ref: [TM, TK] bf16      x_ref: [TK, F0] bf16
    # w1_ref: [F0, F1] bf16     b1_ref: [1, F1] f32     w2_ref: [F1, F2] bf16
    # g_ref (out): [TM, F2] bf16      acc_ref (scratch): [TM, F0] f32
    @pl.when(pl.program_id(1) == 0)
    def _():
        acc_ref[...] = jnp.zeros_like(acc_ref)

    acc_ref[...] += jnp.dot(a_ref[...], x_ref[...],
                            preferred_element_type=jnp.float32)

    @pl.when(pl.program_id(1) == pl.num_programs(1) - 1)
    def _():
        z = jnp.dot(acc_ref[...].astype(jnp.bfloat16), w1_ref[...],
                    preferred_element_type=jnp.float32) + b1_ref[...]
        h = jnp.maximum(z, 0.0)          # ReLU; dropout(p=0.3) is identity in eval
        # fused layer-2 weight projection: G = H1 @ W2  (A@(H W2) == (A@H)@W2)
        g_ref[...] = jnp.dot(h.astype(jnp.bfloat16), w2_ref[...],
                             preferred_element_type=jnp.float32
                             ).astype(g_ref.dtype)


def _gcn_layer2_fc_kernel(a_ref, g_ref, b2_ref, wfc_ref, bfc_ref, y_ref, acc_ref):
    # a_ref: [TM, TK] bf16      g_ref: [TK, F2] bf16
    # b2_ref: [1, F2] f32       wfc_ref: [F2, FO] bf16  bfc_ref: [1, FO] f32
    # y_ref (out): [TM, FO] f32       acc_ref (scratch): [TM, F2] f32
    @pl.when(pl.program_id(1) == 0)
    def _():
        acc_ref[...] = jnp.zeros_like(acc_ref)

    acc_ref[...] += jnp.dot(a_ref[...], g_ref[...],
                            preferred_element_type=jnp.float32)

    @pl.when(pl.program_id(1) == pl.num_programs(1) - 1)
    def _():
        h = jnp.maximum(acc_ref[...] + b2_ref[...], 0.0)   # ReLU; eval dropout = id
        y = jnp.dot(h.astype(jnp.bfloat16), wfc_ref[...],
                    preferred_element_type=jnp.float32) + bfc_ref[...]
        y_ref[...] = y.astype(y_ref.dtype)


# ----------------------------- wrapper ---------------------------------------

def _round_up(x, m):
    return ((x + m - 1) // m) * m


def _vmem_budget_bytes():
    # v7x has 64 MiB physical VMEM per TC -> keep a conservative limit there;
    # v5e / v6e have 128 MiB -> let the pipeline use most of it.
    try:
        kind = jax.devices()[0].device_kind.lower()
    except Exception:
        kind = ""
    if "v7" in kind:
        return 48 * 1024 * 1024
    return 100 * 1024 * 1024


def build_normalized_adjacency(edge_index, edge_weight, num_nodes, num_nodes_pad):
    """Dense D^-1/2 (A + I) D^-1/2 (PyG gcn_norm), built directly at padded size.
    A[t, s] = weight of edge s -> t (flow = source_to_target)."""
    src, dst = edge_index[0], edge_index[1]
    a = jnp.zeros((num_nodes_pad, num_nodes_pad), jnp.float32)
    a = a.at[dst, src].add(edge_weight)
    # add_remaining_self_loops(fill_value=1.0): only where no self-loop exists yet.
    idx = jnp.arange(num_nodes)
    diag = a[idx, idx]
    a = a.at[idx, idx].add(jnp.where(diag == 0.0, 1.0, 0.0))
    deg = jnp.sum(a, axis=1)                      # padded rows: deg = 0 -> dinv = 0
    dinv = jnp.where(deg > 0.0, jax.lax.rsqrt(deg), 0.0)
    return (dinv[:, None] * a * dinv[None, :]).astype(jnp.bfloat16)


def init_params(key, in_feats, out_feats):
    """Deterministic synthetic parameters matching the torch module's shapes."""
    feats = [in_feats, 2 * in_feats, out_feats]
    ks = jax.random.split(key, 6)

    def glorot(k_, shape):
        lim = jnp.sqrt(6.0 / (shape[0] + shape[1]))
        return jax.random.uniform(k_, shape, jnp.float32, -lim, lim)

    return {
        # GCNConv lin weights stored as [in, out] (torch keeps [out, in]).
        "w1": glorot(ks[0], (feats[0], feats[1])),
        "b1": jax.random.normal(ks[1], (feats[1],), jnp.float32) * 0.01,
        "w2": glorot(ks[2], (feats[1], feats[2])),
        "b2": jax.random.normal(ks[3], (feats[2],), jnp.float32) * 0.01,
        # fc weight stored pre-transposed as [in=out_feats, out=out_feats].
        # NOTE: real torch nn.Linear weights ([out, in]) must be transposed here.
        "wfc": glorot(ks[4], (feats[2], out_feats)),
        "bfc": jax.random.normal(ks[5], (out_feats,), jnp.float32) * 0.01,
    }


def gcn_forward(x, edge_index, edge_weight, params, *, tm=256, tk=512, lane=128):
    n, _ = x.shape
    w1, b1 = params["w1"], params["b1"]
    w2, b2 = params["w2"], params["b2"]
    wfc, bfc = params["wfc"], params["bfc"]
    f0, f1 = w1.shape            # in_feats, 2*in_feats
    f2 = w2.shape[1]             # out_feats
    fo = wfc.shape[1]            # out_feats

    # ---- tiling: tm multiple of 16 (bf16 sublane pairs), tk multiple of 128 ----
    tm = _round_up(max(16, min(tm, _round_up(n, 16))), 16)
    tk = _round_up(max(lane, min(tk, _round_up(n, lane))), lane)
    n_pad = _round_up(n, math.lcm(tm, tk))
    f0p, f1p = _round_up(f0, lane), _round_up(f1, lane)
    f2p, fop = _round_up(f2, lane), _round_up(fo, lane)

    # ---- padded / bf16 operands (A_hat built directly at padded size) ----------
    a_hat = build_normalized_adjacency(edge_index, edge_weight, n, n_pad)
    xp   = jnp.pad(x,   ((0, n_pad - n), (0, f0p - f0))).astype(jnp.bfloat16)
    w1p  = jnp.pad(w1,  ((0, f0p - f0), (0, f1p - f1))).astype(jnp.bfloat16)
    b1p  = jnp.pad(b1,  (0, f1p - f1)).reshape(1, f1p).astype(jnp.float32)
    w2p  = jnp.pad(w2,  ((0, f1p - f1), (0, f2p - f2))).astype(jnp.bfloat16)
    b2p  = jnp.pad(b2,  (0, f2p - f2)).reshape(1, f2p).astype(jnp.float32)
    wfcp = jnp.pad(wfc, ((0, f2p - f2), (0, fop - fo))).astype(jnp.bfloat16)
    bfcp = jnp.pad(bfc, (0, fop - fo)).reshape(1, fop).astype(jnp.float32)

    grid = (n_pad // tm, n_pad // tk)
    cparams = pltpu.CompilerParams(
        dimension_semantics=("parallel", "arbitrary"),
        vmem_limit_bytes=_vmem_budget_bytes(),
    )

    a_spec = pl.BlockSpec((tm, tk), lambda i, k: (i, k))
    resident = lambda arr: pl.BlockSpec(arr.shape, lambda i, k: (0, 0))

    # ---- layer 1 (+ fused W2 projection): G = relu(A @ X @ W1 + b1) @ W2 -------
    n_row_tiles = n_pad // tm
    flops1 = (2 * n_pad * n_pad * f0p        # A @ X
              + 2 * n_pad * f0p * f1p        # @ W1
              + 2 * n_pad * f1p * f2p)       # @ W2
    bytes1 = (n_pad * n_pad * 2              # A (bf16), read once
              + n_row_tiles * n_pad * f0p * 2   # X re-streamed per row tile
              + n_pad * f2p * 2)             # G written (bf16)
    g = pl.pallas_call(
        _gcn_layer1_kernel,
        out_shape=jax.ShapeDtypeStruct((n_pad, f2p), jnp.bfloat16),
        grid_spec=pltpu.PrefetchScalarGridSpec(
            num_scalar_prefetch=0, grid=grid,
            in_specs=[a_spec,
                      pl.BlockSpec((tk, f0p), lambda i, k: (k, 0)),
                      resident(w1p), resident(b1p), resident(w2p)],
            out_specs=pl.BlockSpec((tm, f2p), lambda i, k: (i, 0)),
            scratch_shapes=[pltpu.VMEM((tm, f0p), jnp.float32)]),
        compiler_params=cparams,
        cost_estimate=pl.CostEstimate(flops=flops1, transcendentals=0,
                                      bytes_accessed=bytes1),
    )(a_hat, xp, w1p, b1p, w2p)

    # ---- layer 2 + fc: Y = relu(A @ G + b2) @ Wfc + bfc ------------------------
    flops2 = 2 * n_pad * n_pad * f2p + 2 * n_pad * f2p * fop
    bytes2 = (n_pad * n_pad * 2
              + n_row_tiles * n_pad * f2p * 2
              + n_pad * fop * 4)
    y = pl.pallas_call(
        _gcn_layer2_fc_kernel,
        out_shape=jax.ShapeDtypeStruct((n_pad, fop), jnp.float32),
        grid_spec=pltpu.PrefetchScalarGridSpec(
            num_scalar_prefetch=0, grid=grid,
            in_specs=[a_spec,
                      pl.BlockSpec((tk, f2p), lambda i, k: (k, 0)),
                      resident(b2p), resident(wfcp), resident(bfcp)],
            out_specs=pl.BlockSpec((tm, fop), lambda i, k: (i, 0)),
            scratch_shapes=[pltpu.VMEM((tm, f2p), jnp.float32)]),
        compiler_params=cparams,
        cost_estimate=pl.CostEstimate(flops=flops2, transcendentals=0,
                                      bytes_accessed=bytes2),
    )(a_hat, g, b2p, wfcp, bfcp)

    return y[:n, :fo]


# ----------------------------- demo -------------------------------------------

if __name__ == "__main__":
    key = jax.random.PRNGKey(0)
    kx, kw, kp = jax.random.split(key, 3)

    N, in_feats, out_feats = 16, 32, 8

    x = jax.random.normal(kx, (N, in_feats), jnp.float32)
    # small deterministic graph: node i -> (i+1)%N and (i+3)%N (no self loops)
    i = jnp.arange(N)
    src = jnp.concatenate([i, i])
    dst = jnp.concatenate([(i + 1) % N, (i + 3) % N])
    edge_index = jnp.stack([src, dst]).astype(jnp.int32)            # [2, E]
    edge_weight = jax.random.uniform(kw, (edge_index.shape[1],), jnp.float32, 0.5, 1.5)

    params = init_params(kp, in_feats, out_feats)

    # TODO(synk): training-mode dropout (p=0.3) not implemented; eval forward only.
    out = gcn_forward(x, edge_index, edge_weight, params, tm=16, tk=128)
    out = jax.block_until_ready(out)
    assert out.shape == (N, out_feats) and out.dtype == jnp.float32
    print("KERNEL_OK")
</pallas_src>

<mosaic_0001>
module attributes {stable_mosaic.version = 11 : i64} {
  func.func @_gcn_layer1_kernel(%arg0: i32, %arg1: i32, %arg2: memref<16x128xbf16, #tpu.memory_space<vmem>>, %arg3: memref<128x128xbf16, #tpu.memory_space<vmem>>, %arg4: memref<128x128xbf16, #tpu.memory_space<vmem>>, %arg5: memref<1x128xf32, #tpu.memory_space<vmem>>, %arg6: memref<128x128xbf16, #tpu.memory_space<vmem>>, %arg7: memref<16x128xbf16, #tpu.memory_space<vmem>>, %arg8: memref<16x128xf32, #tpu.memory_space<vmem>>) attributes {dimension_semantics = [#tpu.dimension_semantics<parallel>, #tpu.dimension_semantics<arbitrary>], iteration_bounds = array<i64: 8, 1>, scalar_prefetch = 0 : i64, scratch_operands = 1 : i64, tpu.core_type = #tpu.core_type<tc>, window_params = [{transform_indices = @transform_0, window_bounds = array<i64: 16, 128>}, {transform_indices = @transform_1, window_bounds = array<i64: 128, 128>}, {pipeline_mode = #tpu.pipeline_mode<synchronous>, transform_indices = @transform_2, window_bounds = array<i64: 128, 128>}, {pipeline_mode = #tpu.pipeline_mode<synchronous>, transform_indices = @transform_3, window_bounds = array<i64: 1, 128>}, {pipeline_mode = #tpu.pipeline_mode<synchronous>, transform_indices = @transform_4, window_bounds = array<i64: 128, 128>}, {transform_indices = @transform_5, window_bounds = array<i64: 16, 128>}]} {
    %c0_i32 = arith.constant 0 : i32
    %0 = arith.cmpi eq, %arg1, %c0_i32 : i32
    %1 = arith.extui %0 : i1 to i32
    %c0_i32_0 = arith.constant 0 : i32
    %2 = arith.cmpi ne, %1, %c0_i32_0 : i32
    scf.if %2 {
      %cst_10 = arith.constant 0.000000e+00 : f32
      %12 = vector.broadcast %cst_10 : f32 to vector<16x128xf32>
      %c0_11 = arith.constant 0 : index
      %c0_12 = arith.constant 0 : index
      %13 = vector.load %arg8[%c0_11, %c0_12] : memref<16x128xf32, #tpu.memory_space<vmem>>, vector<16x128xf32>
      tpu.vector_store %arg8[%c0_11, %c0_12], %12 {strides = array<i32>} : memref<16x128xf32, #tpu.memory_space<vmem>>, vector<16x128xf32>,
    } else {
    }
    %c0 = arith.constant 0 : index
    %c0_1 = arith.constant 0 : index
    %3 = vector.load %arg8[%c0, %c0_1] : memref<16x128xf32, #tpu.memory_space<vmem>>, vector<16x128xf32>
    %c0_2 = arith.constant 0 : index
    %c0_3 = arith.constant 0 : index
    %4 = vector.load %arg2[%c0_2, %c0_3] : memref<16x128xbf16, #tpu.memory_space<vmem>>, vector<16x128xbf16>
    %c0_4 = arith.constant 0 : index
    %c0_5 = arith.constant 0 : index
    %5 = vector.load %arg3[%c0_4, %c0_5] : memref<128x128xbf16, #tpu.memory_space<vmem>>, vector<128x128xbf16>
    %cst = arith.constant dense<0.000000e+00> : vector<16x128xf32>
    %6 = tpu.matmul %4, %5, %cst {dimension_numbers = #tpu.dot_dimension_numbers<[1], [0], [0], [1], [0, 0, 1, 1], [], []>} : vector<16x128xbf16>, vector<128x128xbf16>, vector<16x128xf32> -> vector<16x128xf32>
    %7 = arith.addf %3, %6 : vector<16x128xf32>
    %c0_6 = arith.constant 0 : index
    %c0_7 = arith.constant 0 : index
    %8 = vector.load %arg8[%c0_6, %c0_7] : memref<16x128xf32, #tpu.memory_space<vmem>>, vector<16x128xf32>
    tpu.vector_store %arg8[%c0_6, %c0_7], %7 {strides = array<i32>} : memref<16x128xf32, #tpu.memory_space<vmem>>, vector<16x128xf32>,
    %c0_i32_8 = arith.constant 0 : i32
    %9 = arith.cmpi eq, %arg1, %c0_i32_8 : i32
    %10 = arith.extui %9 : i1 to i32
    %c0_i32_9 = arith.constant 0 : i32
    %11 = arith.cmpi ne, %10, %c0_i32_9 : i32
    scf.if %11 {
      %c0_10 = arith.constant 0 : index
      %c0_11 = arith.constant 0 : index
      %12 = vector.load %arg8[%c0_10, %c0_11] : memref<16x128xf32, #tpu.memory_space<vmem>>, vector<16x128xf32>
      %13 = arith.truncf %12 : vector<16x128xf32> to vector<16x128xbf16>
      %c0_12 = arith.constant 0 : index
      %c0_13 = arith.constant 0 : index
      %14 = vector.load %arg4[%c0_12, %c0_13] : memref<128x128xbf16, #tpu.memory_space<vmem>>, vector<128x128xbf16>
      %cst_14 = arith.constant dense<0.000000e+00> : vector<16x128xf32>
      %15 = tpu.matmul %13, %14, %cst_14 {dimension_numbers = #tpu.dot_dimension_numbers<[1], [0], [0], [1], [0, 0, 1, 1], [], []>} : vector<16x128xbf16>, vector<128x128xbf16>, vector<16x128xf32> -> vector<16x128xf32>
      %c0_15 = arith.constant 0 : index
      %c0_16 = arith.constant 0 : index
      %16 = vector.load %arg5[%c0_15, %c0_16] : memref<1x128xf32, #tpu.memory_space<vmem>>, vector<1x128xf32>
      %17 = vector.broadcast %16 : vector<1x128xf32> to vector<16x128xf32>
      %18 = arith.addf %15, %17 : vector<16x128xf32>
      %cst_17 = arith.constant 0.000000e+00 : f32
      %19 = vector.broadcast %cst_17 : f32 to vector<16x128xf32>
      %20 = arith.maximumf %18, %19 : vector<16x128xf32>
      %21 = arith.truncf %20 : vector<16x128xf32> to vector<16x128xbf16>
      %c0_18 = arith.constant 0 : index
      %c0_19 = arith.constant 0 : index
      %22 = vector.load %arg6[%c0_18, %c0_19] : memref<128x128xbf16, #tpu.memory_space<vmem>>, vector<128x128xbf16>
      %cst_20 = arith.constant dense<0.000000e+00> : vector<16x128xf32>
      %23 = tpu.matmul %21, %22, %cst_20 {dimension_numbers = #tpu.dot_dimension_numbers<[1], [0], [0], [1], [0, 0, 1, 1], [], []>} : vector<16x128xbf16>, vector<128x128xbf16>, vector<16x128xf32> -> vector<16x128xf32>
      %24 = arith.truncf %23 : vector<16x128xf32> to vector<16x128xbf16>
      %c0_21 = arith.constant 0 : index
      %c0_22 = arith.constant 0 : index
      %25 = vector.load %arg7[%c0_21, %c0_22] : memref<16x128xbf16, #tpu.memory_space<vmem>>, vector<16x128xbf16>
      tpu.vector_store %arg7[%c0_21, %c0_22], %24 {strides = array<i32>} : memref<16x128xbf16, #tpu.memory_space<vmem>>, vector<16x128xbf16>,
    } else {
    }
    return
  }
  func.func @transform_0(%arg0: i32, %arg1: i32) -> (i32, i32) {
    %c0_i32 = arith.constant 0 : i32
    return %arg0, %arg1 : i32, i32
  }
  func.func @transform_1(%arg0: i32, %arg1: i32) -> (i32, i32) {
    %c0_i32 = arith.constant 0 : i32
    %c0_i32_0 = arith.constant 0 : i32
    return %arg1, %c0_i32 : i32, i32
  }
  func.func @transform_2(%arg0: i32, %arg1: i32) -> (i32, i32) {
    %c0_i32 = arith.constant 0 : i32
    %c0_i32_0 = arith.constant 0 : i32
    %c0_i32_1 = arith.constant 0 : i32
    return %c0_i32, %c0_i32_0 : i32, i32
  }
  func.func @transform_3(%arg0: i32, %arg1: i32) -> (i32, i32) {
    %c0_i32 = arith.constant 0 : i32
    %c0_i32_0 = arith.constant 0 : i32
    %c0_i32_1 = arith.constant 0 : i32
    return %c0_i32, %c0_i32_0 : i32, i32
  }
  func.func @transform_4(%arg0: i32, %arg1: i32) -> (i32, i32) {
    %c0_i32 = arith.constant 0 : i32
    %c0_i32_0 = arith.constant 0 : i32
    %c0_i32_1 = arith.constant 0 : i32
    return %c0_i32, %c0_i32_0 : i32, i32
  }
  func.func @transform_5(%arg0: i32, %arg1: i32) -> (i32, i32) {
    %c0_i32 = arith.constant 0 : i32
    %c0_i32_0 = arith.constant 0 : i32
    return %arg0, %c0_i32 : i32, i32
  }
}

</mosaic_0001>

<llo_original>
// kernel: tpu_custom_call.1
$region0: #{tpu_custom_call.1}
  #allocation0 [shape = 'u32[]', space=smem, size = 0x4, offset = 0x4, fixed_abs, tag = 'smem constant byte address 0x4 - core index']
  #allocation1 [shape = 'u32[72,128]{1,0:T(1,128)}', space=vmem, size = 0x9000, scoped, tag = 'internal scratch']
  #allocation2 [shape = 'f32[16,128]{1,0:T(8,128)}', space=vmem, size = 0x2000, scoped, tag = 'scratch operand']
  %s0 = inlined_call_operand.hbm [shape: bf16[128,128], index: 0, kind: input, shape index: {}]
  %s1 = inlined_call_operand.hbm [shape: bf16[128,128], index: 1, kind: input, shape index: {}]
  %s2 = inlined_call_operand.hbm [shape: bf16[128,128], index: 2, kind: input, shape index: {}]
  %s3 = inlined_call_operand.vmem [shape: f32[1,128], index: 3, kind: input, shape index: {}]
  %s4 = inlined_call_operand.hbm [shape: bf16[128,128], index: 4, kind: input, shape index: {}]
  %s5 = inlined_call_operand.hbm [shape: bf16[128,128], index: 5, kind: output, shape index: {}]
  %s6 = sld [smem:[#allocation0]]
  $region77: #{tpu_custom_call.1} parent=0
    _
  %s8 = ssub.s32 1, %s6
  %s9 = scalar_select 0, %s8, %s6
  $region1: #{tpu_custom_call.1} parent=0
    #allocation3 [shape = 'u8[8192]{0}', space=vmem, size = 0x2000, scoped, tag = 'input window, operand 0']
    #allocation4 [shape = 's32[2]{0}', space=sflag, size = 0x8, scoped, tag = 'scoped memory for tpu_custom_call.1']
    #allocation5 [shape = 's32[2]{0}', space=sflag, size = 0x8, scoped, tag = 'scoped memory for tpu_custom_call.1']
    #allocation6 [shape = 'u8[32768]{0}', space=vmem, size = 0x8000, scoped, tag = 'input window, operand 1, single buffered']
    #allocation7 [shape = 's32[1]{0}', space=sflag, size = 0x4, scoped, tag = 'scoped memory for tpu_custom_call.1']
    #allocation8 [shape = 'u8[32768]{0}', space=vmem, size = 0x8000, scoped, tag = 'input window, operand 2, single buffered']
    #allocation9 [shape = 'u8[32768]{0}', space=vmem, size = 0x8000, scoped, tag = 'input window, operand 4, single buffered']
    #allocation10 [shape = 's32[1]{0}', space=sflag, size = 0x4, scoped, tag = 'scoped memory for tpu_custom_call.1']
    #allocation11 [shape = 'u8[8192]{0}', space=vmem, size = 0x2000, scoped, tag = 'output window, operand 0']
    %10 = vsyncpa [#allocation4], 0
    %s11 = scalar_lea.sflag [#allocation4], 1
    %12 = vsyncpa %s11, 0
    %13 = vsyncpa [#allocation7], 0
    %14 = vsyncpa [#allocation10], 0
    %15 = vsyncpa [#allocation5], 0
    %s16 = scalar_lea.sflag [#allocation5], 1
    %17 = vsyncpa %s16, 0
    loop: start=0, step=1, limit=10
    $region2: #{tpu_custom_call.1} parent=1 // loop_pre_header
      _
    $region3: #{tpu_custom_call.1} parent=1 // loop_header
      %s19 = sphi 0, %s23
      %p20 = scmp.ge.s32.totalorder %s19, 10
      %s26 = sphi 0, %s38
      %s27 = sphi 0, %s34
      %s28 = sphi 0, %s26
      %s29 = sphi 0, %s27
      %s30 = sphi 0, %s28
      %s31 = sphi 0, %s29
      %s43 = sphi 0, %s45
      %s46 = sphi 0, %s43
      %s47 = sphi 0, %s46
      %s63 = sphi 0, %s47
      %s69 = sphi 0, %s71
      %s72 = sphi 0, %s69
      %s73 = sphi 0, %s72
      %s89 = sphi 0, %s73
      %s93 = sphi 0, %s93
      %s95 = sphi 0, %s93
      %s96 = sphi 0, %s95
      %s110 = sphi 0, %s96
      %s114 = sphi 0, %s114
      %s116 = sphi 0, %s114
      %s117 = sphi 0, %s116
      %s131 = sphi 0, %s117
      %s135 = sphi 0, %s135
      %s137 = sphi 0, %s135
      %s138 = sphi 0, %s137
      %s152 = sphi 0, %s138
      %s158 = sphi 0, %s160
      %s161 = sphi 0, %s158
      %s162 = sphi 0, %s161
      %s178 = sphi 0, %s162
    $region4: #{tpu_custom_call.1} parent=1 // loop_header_branch
      %22 = sbr.rel (%p20) target = $region8
    $region5: #{tpu_custom_call.1} parent=1 // loop_body
      %s24 = ssub.s32 %s19, 1
      %s25 = ssub.s32 %s19, 2
      %s32 = sadd.s32 1, %s27
      %p33 = scmp.ge.s32.totalorder %s32, 1
      %s34 = scalar_select %p33, 0, %s32
      %s35 = sadd.s32 1, %s26
      %s36 = scalar_select %p33, %s35, %s26
      %p37 = scmp.ge.s32.totalorder %s36, 8
      %s38 = scalar_select %p37, 0, %s36
      %s39 = ssub.s32 %s26, %s38
      %s40 = ssub.s32 %s27, %s34
      %s41 = sor.u32 %s39, %s40
      %p42 = scmp.eq.s32.totalorder %s41, 0
      %s44 = sadd.s32 %s43, 1
      %s45 = scalar_select %p42, %s43, %s44
      %p48 = pneg %p42
      %p49 = scmp.eq.s32.totalorder %s19, 7
      %p50 = por %p48, %p49
      %p51 = scmp.ne.s32.totalorder %s43, %s46
      %p52 = scmp.eq.s32.totalorder %s19, 0
      %p53 = por %p51, %p52
      %p54 = scmp.ne.s32.totalorder %s43, %s46
      %p55 = scmp.eq.s32.totalorder %s24, 7
      %p56 = por %p54, %p55
      %p57 = scmp.ne.s32.totalorder %s46, %s47
      %p58 = scmp.eq.s32.totalorder %s24, 0
      %p59 = por %p57, %p58
      %p60 = scmp.ne.s32.totalorder %s46, %s47
      %p61 = scmp.eq.s32.totalorder %s25, 7
      %p62 = por %p60, %p61
      %p64 = scmp.ne.s32.totalorder %s47, %s63
      %p65 = scmp.eq.s32.totalorder %s25, 0
      %p66 = por %p64, %p65
      %s67 = ssub.s32 %s27, %s34
      %p68 = scmp.eq.s32.totalorder %s67, 0
      %s70 = sadd.s32 %s69, 1
      %s71 = scalar_select %p68, %s69, %s70
      %p74 = pneg %p68
      %p75 = scmp.eq.s32.totalorder %s19, 7
      %p76 = por %p74, %p75
      %p77 = scmp.ne.s32.totalorder %s69, %s72
      %p78 = scmp.eq.s32.totalorder %s19, 0
      %p79 = por %p77, %p78
      %p80 = scmp.ne.s32.totalorder %s69, %s72
      %p81 = scmp.eq.s32.totalorder %s24, 7
      %p82 = por %p80, %p81
      %p83 = scmp.ne.s32.totalorder %s72, %s73
      %p84 = scmp.eq.s32.totalorder %s24, 0
      %p85 = por %p83, %p84
      %p86 = scmp.ne.s32.totalorder %s72, %s73
      %p87 = scmp.eq.s32.totalorder %s25, 7
      %p88 = por %p86, %p87
      %p90 = scmp.ne.s32.totalorder %s73, %s89
      %p91 = scmp.eq.s32.totalorder %s25, 0
      %p92 = por %p90, %p91
      %s94 = sadd.s32 %s93, 1
      %p97 = scmp.eq.s32.totalorder %s19, 7
      %p98 = scmp.ne.s32.totalorder %s93, %s95
      %p99 = scmp.eq.s32.totalorder %s19, 0
      %p100 = por %p98, %p99
      %p101 = scmp.ne.s32.totalorder %s93, %s95
      %p102 = scmp.eq.s32.totalorder %s24, 7
      %p103 = por %p101, %p102
      %p104 = scmp.ne.s32.totalorder %s95, %s96
      %p105 = scmp.eq.s32.totalorder %s24, 0
      %p106 = por %p104, %p105
      %p107 = scmp.ne.s32.totalorder %s95, %s96
      %p108 = scmp.eq.s32.totalorder %s25, 7
      %p109 = por %p107, %p108
      %p111 = scmp.ne.s32.totalorder %s96, %s110
      %p112 = scmp.eq.s32.totalorder %s25, 0
      %p113 = por %p111, %p112
      %s115 = sadd.s32 %s114, 1
      %p118 = scmp.eq.s32.totalorder %s19, 7
      %p119 = scmp.ne.s32.totalorder %s114, %s116
      %p120 = scmp.eq.s32.totalorder %s19, 0
      %p121 = por %p119, %p120
      %p122 = scmp.ne.s32.totalorder %s114, %s116
      %p123 = scmp.eq.s32.totalorder %s24, 7
      %p124 = por %p122, %p123
      %p125 = scmp.ne.s32.totalorder %s116, %s117
      %p126 = scmp.eq.s32.totalorder %s24, 0
      %p127 = por %p125, %p126
      %p128 = scmp.ne.s32.totalorder %s116, %s117
      %p129 = scmp.eq.s32.totalorder %s25, 7
      %p130 = por %p128, %p129
      %p132 = scmp.ne.s32.totalorder %s117, %s131
      %p133 = scmp.eq.s32.totalorder %s25, 0
      %p134 = por %p132, %p133
      %s136 = sadd.s32 %s135, 1
      %p139 = scmp.eq.s32.totalorder %s19, 7
      %p140 = scmp.ne.s32.totalorder %s135, %s137
      %p141 = scmp.eq.s32.totalorder %s19, 0
      %p142 = por %p140, %p141
      %p143 = scmp.ne.s32.totalorder %s135, %s137
      %p144 = scmp.eq.s32.totalorder %s24, 7
      %p145 = por %p143, %p144
      %p146 = scmp.ne.s32.totalorder %s137, %s138
      %p147 = scmp.eq.s32.totalorder %s24, 0
      %p148 = por %p146, %p147
      %p149 = scmp.ne.s32.totalorder %s137, %s138
      %p150 = scmp.eq.s32.totalorder %s25, 7
      %p151 = por %p149, %p150
      %p153 = scmp.ne.s32.totalorder %s138, %s152
      %p154 = scmp.eq.s32.totalorder %s25, 0
      %p155 = por %p153, %p154
      %s156 = ssub.s32 %s26, %s38
      %p157 = scmp.eq.s32.totalorder %s156, 0
      %s159 = sadd.s32 %s158, 1
      %s160 = scalar_select %p157, %s158, %s159
      %p163 = pneg %p157
      %p164 = scmp.eq.s32.totalorder %s19, 7
      %p165 = por %p163, %p164
      %p166 = scmp.ne.s32.totalorder %s158, %s161
      %p167 = scmp.eq.s32.totalorder %s19, 0
      %p168 = por %p166, %p167
      %p169 = scmp.ne.s32.totalorder %s158, %s161
      %p170 = scmp.eq.s32.totalorder %s24, 7
      %p171 = por %p169, %p170
      %p172 = scmp.ne.s32.totalorder %s161, %s162
      %p173 = scmp.eq.s32.totalorder %s24, 0
      %p174 = por %p172, %p173
      %p175 = scmp.ne.s32.totalorder %s161, %s162
      %p176 = scmp.eq.s32.totalorder %s25, 7
      %p177 = por %p175, %p176
      %p179 = scmp.ne.s32.totalorder %s162, %s178
      %p180 = scmp.eq.s32.totalorder %s25, 0
      %p181 = por %p179, %p180
      %p182 = scmp.le.s32.totalorder 1, %s19
      %p183 = scmp.lt.s32.totalorder %s19, 9
      %p184 = pnand %p182, %p183
      %p185 = pneg %p184
      // Predicated region
      $region9: #{tpu_custom_call.1} parent=5 // pred_check
        _
      $region10: #{tpu_custom_call.1} parent=5 // pred_check_branch
        %187 = sbr.rel (%p184) target = $region12
      $region11: #{tpu_custom_call.1} parent=5 // pred_region
        %s188 = ssub.s32 %s19, 1
        // Predicated region
        $region13: #{tpu_custom_call.1} parent=11 // pred_check
          %p189 = pneg %p85
        $region14: #{tpu_custom_call.1} parent=11 // pred_check_branch
          %191 = sbr.rel (%p189) target = $region16
        $region15: #{tpu_custom_call.1} parent=11 // pred_region
          %s192 = smul.u32 16, %s29
          %194 = vsyncadd [#allocation7], 0
          %s195 = smul.addr %s192, 4
          %s196 = scalar_lea.hbm %s1, %s195
          %s197 = sshll.u32 %s196, 4
          %s198 = int_to_ptr.hbm [resolvable:$true] %s197
          %s199 = sshll.u32 [#allocation6], 4
          %s200 = int_to_ptr.vmem [resolvable:$true] %s199
          %205 = dma.hbm_to_vmem [thread:$0]  %s198, 1024, %s200, [#allocation7], 64, 64, 4
        $region16: #{tpu_custom_call.1} parent=11 // pred_fallthru
          _
        // Predicated region
        $region17: #{tpu_custom_call.1} parent=11 // pred_check
          %p206 = pneg %p106
        $region18: #{tpu_custom_call.1} parent=11 // pred_check_branch
          %208 = sbr.rel (%p206) target = $region20
        $region19: #{tpu_custom_call.1} parent=11 // pred_region
          %210 = vsyncadd [#allocation7], 0
          %s211 = sshll.u32 %s2, 4
          %s212 = int_to_ptr.hbm [resolvable:$true] %s211
          %s213 = sshll.u32 [#allocation8], 4
          %s214 = int_to_ptr.vmem [resolvable:$true] %s213
          %219 = dma.hbm_to_vmem [thread:$0]  %s212, 1024, %s214, [#allocation7], 64, 64, 4
        $region20: #{tpu_custom_call.1} parent=11 // pred_fallthru
          _
        // Predicated region
        $region21: #{tpu_custom_call.1} parent=11 // pred_check
          %p220 = pneg %p127
        $region22: #{tpu_custom_call.1} parent=11 // pred_check_branch
          %222 = sbr.rel (%p220) target = $region24
        $region23: #{tpu_custom_call.1} parent=11 // pred_region
          _
        $region24: #{tpu_custom_call.1} parent=11 // pred_fallthru
          _
        // Predicated region
        $region25: #{tpu_custom_call.1} parent=11 // pred_check
          %p223 = pneg %p148
        $region26: #{tpu_custom_call.1} parent=11 // pred_check_branch
          %225 = sbr.rel (%p223) target = $region28
        $region27: #{tpu_custom_call.1} parent=11 // pred_region
          %227 = vsyncadd [#allocation10], 0
          %s228 = sshll.u32 %s4, 4
          %s229 = int_to_ptr.hbm [resolvable:$true] %s228
          %s230 = sshll.u32 [#allocation9], 4
          %s231 = int_to_ptr.vmem [resolvable:$true] %s230
          %236 = dma.hbm_to_vmem [thread:$0]  %s229, 1024, %s231, [#allocation10], 64, 64, 4
        $region28: #{tpu_custom_call.1} parent=11 // pred_fallthru
          _
      $region12: #{tpu_custom_call.1} parent=5 // pred_fallthru
        _
      %p237 = scmp.lt.s32.totalorder %s19, 8
      // Predicated region
      $region29: #{tpu_custom_call.1} parent=5 // pred_check
        %p238 = pneg %p237
      $region30: #{tpu_custom_call.1} parent=5 // pred_check_branch
        %240 = sbr.rel (%p238) target = $region32
      $region31: #{tpu_custom_call.1} parent=5 // pred_region
        // Predicated region
        $region33: #{tpu_custom_call.1} parent=31 // pred_check
          %p241 = pneg %p53
        $region34: #{tpu_custom_call.1} parent=31 // pred_check_branch
          %243 = sbr.rel (%p241) target = $region36
        $region35: #{tpu_custom_call.1} parent=31 // pred_region
          %s244 = sand.u32 %s43, 1
          %s245 = scalar_lea.sflag [#allocation4], %s244
          %s246 = sand.u32 %s43, 1
          %s247 = smul.addr %s246, 8
          %s248 = scalar_lea.vmem [#allocation3], %s247
          %s249 = smul.u32 2, %s26
          %251 = vsyncadd %s245, 0
          %s252 = sadd.s32 %s27, %s249
          %s253 = smul.addr %s252, 4
          %s254 = scalar_lea.hbm %s0, %s253
          %s255 = sshll.u32 %s254, 4
          %s256 = int_to_ptr.hbm [resolvable:$true] %s255
          %s257 = sshll.u32 %s248, 4
          %s258 = int_to_ptr.vmem [resolvable:$true] %s257
          %263 = dma.hbm_to_vmem [thread:$0]  %s256, 128, %s258, %s245, 64, 64, 4
        $region36: #{tpu_custom_call.1} parent=31 // pred_fallthru
          _
      $region32: #{tpu_custom_call.1} parent=5 // pred_fallthru
        _
      %p264 = scmp.le.s32.totalorder 1, %s19
      %p265 = scmp.lt.s32.totalorder %s19, 9
      %p266 = pnand %p264, %p265
      %p267 = pneg %p266
      // Predicated region
      $region37: #{tpu_custom_call.1} parent=5 // pred_check
        _
      $region38: #{tpu_custom_call.1} parent=5 // pred_check_branch
        %269 = sbr.rel (%p266) target = $region40
      $region39: #{tpu_custom_call.1} parent=5 // pred_region
        %s270 = ssub.s32 %s19, 1
        %s271 = sand.u32 %s46, 1
        %s272 = scalar_lea.sflag [#allocation4], %s271
        %s273 = sand.u32 %s46, 1
        %s274 = smul.addr %s273, 8
        %s275 = scalar_lea.vmem [#allocation3], %s274
        // Predicated region
        $region41: #{tpu_custom_call.1} parent=39 // pred_check
          %p276 = pneg %p59
        $region42: #{tpu_custom_call.1} parent=39 // pred_check_branch
          %278 = sbr.rel (%p276) target = $region44
        $region43: #{tpu_custom_call.1} parent=39 // pred_region
          %280 = dma.done %s272, 128
        $region44: #{tpu_custom_call.1} parent=39 // pred_fallthru
          _
        // Predicated region
        $region45: #{tpu_custom_call.1} parent=39 // pred_check
          %p281 = pneg %p85
        $region46: #{tpu_custom_call.1} parent=39 // pred_check_branch
          %283 = sbr.rel (%p281) target = $region48
        $region47: #{tpu_custom_call.1} parent=39 // pred_region
          %285 = dma.done [#allocation7], 1024
        $region48: #{tpu_custom_call.1} parent=39 // pred_fallthru
          _
        // Predicated region
        $region49: #{tpu_custom_call.1} parent=39 // pred_check
          %p286 = pneg %p106
        $region50: #{tpu_custom_call.1} parent=39 // pred_check_branch
          %288 = sbr.rel (%p286) target = $region52
        $region51: #{tpu_custom_call.1} parent=39 // pred_region
          %290 = dma.done [#allocation7], 1024
        $region52: #{tpu_custom_call.1} parent=39 // pred_fallthru
          _
        // Predicated region
        $region53: #{tpu_custom_call.1} parent=39 // pred_check
          %p291 = pneg %p148
        $region54: #{tpu_custom_call.1} parent=39 // pred_check_branch
          %293 = sbr.rel (%p291) target = $region56
        $region55: #{tpu_custom_call.1} parent=39 // pred_region
          %295 = dma.done [#allocation10], 1024
        $region56: #{tpu_custom_call.1} parent=39 // pred_fallthru
          _
        %s296 = sand.u32 %s46, 1
        %s297 = scalar_lea.sflag [#allocation4], %s296
        %s298 = sand.u32 %s46, 1
        %s299 = smul.addr %s298, 8
        %s300 = scalar_lea.vmem [#allocation3], %s299
        %p301 = pneg %p59
        %p302 = pneg %p56
        %p303 = pneg %p85
        %p304 = pneg %p82
        %p305 = pneg %p106
        %p306 = pneg %p103
        %p307 = pneg %p127
        %p308 = pneg %p124
        %p309 = pneg %p148
        %p310 = pneg %p145
        %p311 = pneg %p174
        %p312 = pneg %p171
        %s313 = sand.u32 %s161, 1
        %s314 = scalar_lea.sflag [#allocation5], %s313
        %s315 = sand.u32 %s161, 1
        %s316 = smul.addr %s315, 8
        %s317 = scalar_lea.vmem [#allocation11], %s316
        %s318 = smul.u32 2, %s28
        %s319 = smul.u32 16, %s29
        %s320 = smul.u32 2, %s28
        %p321 = scmp.eq.s32.totalorder %s29, 0
        // Predicated region
        $region57: #{tpu_custom_call.1} parent=39 // pred_check
          %p322 = pneg %p321
        $region58: #{tpu_custom_call.1} parent=39 // pred_check_branch
          %324 = sbr.rel (%p322) target = $region60
        $region59: #{tpu_custom_call.1} parent=39 // pred_region
          %325 = vst [vmem:[#allocation2] sm:$0xff] 0.0
          %326 = vst [vmem:[#allocation2 + $0x8] sm:$0xff] 0.0
        $region60: #{tpu_custom_call.1} parent=39 // pred_fallthru
          _
        %v327 = vld [vmem:[#allocation2] sm:$0xff]
        %v328 = vld [vmem:[#allocation2 + $0x8] sm:$0xff]
        %v329 = vld [vmem:[%s275] sm:$0xf]
        %v330 = vld [vmem:[%s275 + $0x4] sm:$0xf]
        %v331 = vld [vmem:[#allocation6] sm:$0xf]
        %v332 = vld [vmem:[#allocation6 + $0x4] sm:$0xf]
        %v333 = vld [vmem:[#allocation6 + $0x8] sm:$0xf]
        %v334 = vld [vmem:[#allocation6 + $0xc] sm:$0xf]
        %v335 = vld [vmem:[#allocation6 + $0x10] sm:$0xf]
        %v336 = vld [vmem:[#allocation6 + $0x14] sm:$0xf]
        %v337 = vld [vmem:[#allocation6 + $0x18] sm:$0xf]
        %v338 = vld [vmem:[#allocation6 + $0x1c] sm:$0xf]
        %v339 = vld [vmem:[#allocation6 + $0x20] sm:$0xf]
        %v340 = vld [vmem:[#allocation6 + $0x24] sm:$0xf]
        %v341 = vld [vmem:[#allocation6 + $0x28] sm:$0xf]
        %v342 = vld [vmem:[#allocation6 + $0x2c] sm:$0xf]
        %v343 = vld [vmem:[#allocation6 + $0x30] sm:$0xf]
        %v344 = vld [vmem:[#allocation6 + $0x34] sm:$0xf]
        %v345 = vld [vmem:[#allocation6 + $0x38] sm:$0xf]
        %v346 = vld [vmem:[#allocation6 + $0x3c] sm:$0xf]
        %v349 = vunpack.c.l.b16 %v329
        %v350 = vunpack.c.l.b16 %v330
        %v351 = vpack.c.b16 %v350, %v349
        %v369 = vunpack.c.l.b16 %v331
        %v370 = vunpack.c.l.b16 %v332
        %v371 = vunpack.c.l.b16 %v333
        %v372 = vunpack.c.l.b16 %v334
        %v373 = vunpack.c.l.b16 %v335
        %v374 = vunpack.c.l.b16 %v336
        %v375 = vunpack.c.l.b16 %v337
        %v376 = vunpack.c.l.b16 %v338
        %v377 = vunpack.c.l.b16 %v339
        %v378 = vunpack.c.l.b16 %v340
        %v379 = vunpack.c.l.b16 %v341
        %v380 = vunpack.c.l.b16 %v342
        %v381 = vunpack.c.l.b16 %v343
        %v382 = vunpack.c.l.b16 %v344
        %v383 = vunpack.c.l.b16 %v345
        %v384 = vunpack.c.l.b16 %v346
        %v385 = vpack.c.b16 %v370, %v369
        %v386 = vpack.c.b16 %v372, %v371
        %v387 = vpack.c.b16 %v374, %v373
        %v388 = vpack.c.b16 %v376, %v375
        %v389 = vpack.c.b16 %v378, %v377
        %v390 = vpack.c.b16 %v380, %v379
        %v391 = vpack.c.b16 %v382, %v381
        %v392 = vpack.c.b16 %v384, %v383
        %401 = vmatpush.bf16.msra.mxu0 %v392
        %402 = vmatpush.bf16.msra.mxu0 %v391
        %403 = vmatpush.bf16.msra.mxu0 %v390
        %404 = vmatpush.bf16.msra.mxu0 %v389
        %405 = vmatpush.bf16.msra.mxu0 %v388
        %406 = vmatpush.bf16.msra.mxu0 %v387
        %407 = vmatpush.bf16.msra.mxu0 %v386
        %408 = vmatpush.bf16.msra.mxu0 %v385
        %409 = vmatmul.bf16.gmra.mxu0 %v351
        %v410 = vpop.f32.mrf.mxu0
        %v411 = vadd.f32 0.0, %v410
        %v412 = vpop.f32.mrf.mxu0
        %v413 = vadd.f32 0.0, %v412
        %414 = vdwg.mxu0
        %v415 = vadd.f32 %v327, %v411
        %v416 = vadd.f32 %v328, %v413
        %417 = vst [vmem:[#allocation2] sm:$0xff] %v415
        %418 = vst [vmem:[#allocation2 + $0x8] sm:$0xff] %v416
        // Predicated region
        $region61: #{tpu_custom_call.1} parent=39 // pred_check
          %p419 = pneg %p321
        $region62: #{tpu_custom_call.1} parent=39 // pred_check_branch
          %421 = sbr.rel (%p419) target = $region64
        $region63: #{tpu_custom_call.1} parent=39 // pred_region
          %v422 = vld [vmem:[#allocation2] sm:$0xff]
          %v423 = vld [vmem:[#allocation2 + $0x8] sm:$0xff]
          %v424 = vpack.c.bf16 %v423, %v422
          %v425 = vld [vmem:[#allocation8] sm:$0xf]
          %v426 = vld [vmem:[#allocation8 + $0x4] sm:$0xf]
          %v427 = vld [vmem:[#allocation8 + $0x8] sm:$0xf]
          %v428 = vld [vmem:[#allocation8 + $0xc] sm:$0xf]
          %v429 = vld [vmem:[#allocation8 + $0x10] sm:$0xf]
          %v430 = vld [vmem:[#allocation8 + $0x14] sm:$0xf]
          %v431 = vld [vmem:[#allocation8 + $0x18] sm:$0xf]
          %v432 = vld [vmem:[#allocation8 + $0x1c] sm:$0xf]
          %v433 = vld [vmem:[#allocation8 + $0x20] sm:$0xf]
          %v434 = vld [vmem:[#allocation8 + $0x24] sm:$0xf]
          %v435 = vld [vmem:[#allocation8 + $0x28] sm:$0xf]
          %v436 = vld [vmem:[#allocation8 + $0x2c] sm:$0xf]
          %v437 = vld [vmem:[#allocation8 + $0x30] sm:$0xf]
          %v438 = vld [vmem:[#allocation8 + $0x34] sm:$0xf]
          %v439 = vld [vmem:[#allocation8 + $0x38] sm:$0xf]
          %v440 = vld [vmem:[#allocation8 + $0x3c] sm:$0xf]
          %v441 = vld [vmem:[%s3] sm:$0x1]
          %v443 = vperm.slane %v441, 0
          %v461 = vunpack.c.l.b16 %v425
          %v462 = vunpack.c.l.b16 %v426
          %v463 = vunpack.c.l.b16 %v427
          %v464 = vunpack.c.l.b16 %v428
          %v465 = vunpack.c.l.b16 %v429
          %v466 = vunpack.c.l.b16 %v430
          %v467 = vunpack.c.l.b16 %v431
          %v468 = vunpack.c.l.b16 %v432
          %v469 = vunpack.c.l.b16 %v433
          %v470 = vunpack.c.l.b16 %v434
          %v471 = vunpack.c.l.b16 %v435
          %v472 = vunpack.c.l.b16 %v436
          %v473 = vunpack.c.l.b16 %v437
          %v474 = vunpack.c.l.b16 %v438
          %v475 = vunpack.c.l.b16 %v439
          %v476 = vunpack.c.l.b16 %v440
          %v477 = vpack.c.b16 %v462, %v461
          %v478 = vpack.c.b16 %v464, %v463
          %v479 = vpack.c.b16 %v466, %v465
          %v480 = vpack.c.b16 %v468, %v467
          %v481 = vpack.c.b16 %v470, %v469
          %v482 = vpack.c.b16 %v472, %v471
          %v483 = vpack.c.b16 %v474, %v473
          %v484 = vpack.c.b16 %v476, %v475
          %493 = vmatpush.bf16.msra.mxu0 %v484
          %494 = vmatpush.bf16.msra.mxu0 %v483
          %495 = vmatpush.bf16.msra.mxu0 %v482
          %496 = vmatpush.bf16.msra.mxu0 %v481
          %497 = vmatpush.bf16.msra.mxu0 %v480
          %498 = vmatpush.bf16.msra.mxu0 %v479
          %499 = vmatpush.bf16.msra.mxu0 %v478
          %500 = vmatpush.bf16.msra.mxu0 %v477
          %501 = vmatmul.bf16.gmra.mxu0 %v424
          %v502 = vpop.f32.mrf.mxu0
          %v503 = vadd.f32 %v443, %v502
          %v504 = vpop.f32.mrf.mxu0
          %v505 = vadd.f32 %v443, %v504
          %506 = vdwg.mxu0
          %v507 = vmax.f32 %v503, 0.0
          %v508 = vmax.f32 %v505, 0.0
          %v509 = vpack.c.bf16 %v508, %v507
          %v510 = vld [vmem:[#allocation9] sm:$0xf]
          %v511 = vld [vmem:[#allocation9 + $0x4] sm:$0xf]
          %v512 = vld [vmem:[#allocation9 + $0x8] sm:$0xf]
          %v513 = vld [vmem:[#allocation9 + $0xc] sm:$0xf]
          %v514 = vld [vmem:[#allocation9 + $0x10] sm:$0xf]
          %v515 = vld [vmem:[#allocation9 + $0x14] sm:$0xf]
          %v516 = vld [vmem:[#allocation9 + $0x18] sm:$0xf]
          %v517 = vld [vmem:[#allocation9 + $0x1c] sm:$0xf]
          %v518 = vld [vmem:[#allocation9 + $0x20] sm:$0xf]
          %v519 = vld [vmem:[#allocation9 + $0x24] sm:$0xf]
          %v520 = vld [vmem:[#allocation9 + $0x28] sm:$0xf]
          %v521 = vld [vmem:[#allocation9 + $0x2c] sm:$0xf]
          %v522 = vld [vmem:[#allocation9 + $0x30] sm:$0xf]
          %v523 = vld [vmem:[#allocation9 + $0x34] sm:$0xf]
          %v524 = vld [vmem:[#allocation9 + $0x38] sm:$0xf]
          %v525 = vld [vmem:[#allocation9 + $0x3c] sm:$0xf]
          %v542 = vunpack.c.l.b16 %v510
          %v543 = vunpack.c.l.b16 %v511
          %v544 = vunpack.c.l.b16 %v512
          %v545 = vunpack.c.l.b16 %v513
          %v546 = vunpack.c.l.b16 %v514
          %v547 = vunpack.c.l.b16 %v515
          %v548 = vunpack.c.l.b16 %v516
          %v549 = vunpack.c.l.b16 %v517
          %v550 = vunpack.c.l.b16 %v518
          %v551 = vunpack.c.l.b16 %v519
          %v552 = vunpack.c.l.b16 %v520
          %v553 = vunpack.c.l.b16 %v521
          %v554 = vunpack.c.l.b16 %v522
          %v555 = vunpack.c.l.b16 %v523
          %v556 = vunpack.c.l.b16 %v524
          %v557 = vunpack.c.l.b16 %v525
          %v558 = vpack.c.b16 %v543, %v542
          %v559 = vpack.c.b16 %v545, %v544
          %v560 = vpack.c.b16 %v547, %v546
          %v561 = vpack.c.b16 %v549, %v548
          %v562 = vpack.c.b16 %v551, %v550
          %v563 = vpack.c.b16 %v553, %v552
          %v564 = vpack.c.b16 %v555, %v554
          %v565 = vpack.c.b16 %v557, %v556
          %574 = vmatpush.bf16.msra.mxu0 %v565
          %575 = vmatpush.bf16.msra.mxu0 %v564
          %576 = vmatpush.bf16.msra.mxu0 %v563
          %577 = vmatpush.bf16.msra.mxu0 %v562
          %578 = vmatpush.bf16.msra.mxu0 %v561
          %579 = vmatpush.bf16.msra.mxu0 %v560
          %580 = vmatpush.bf16.msra.mxu0 %v559
          %581 = vmatpush.bf16.msra.mxu0 %v558
          %582 = vmatmul.bf16.gmra.mxu0 %v509
          %v583 = vpop.f32.mrf.mxu0
          %v584 = vadd.f32 0.0, %v583
          %v585 = vpop.f32.mrf.mxu0
          %v586 = vadd.f32 0.0, %v585
          %587 = vdwg.mxu0
          %v588 = vpack.c.bf16 %v584, %v584
          %v589 = vpack.c.bf16 %v586, %v586
          %590 = vst [vmem:[%s317] sm:$0xf] %v588
          %591 = vst [vmem:[%s317 + $0x4] sm:$0xf] %v589
        $region64: #{tpu_custom_call.1} parent=39 // pred_fallthru
          _
        %s592 = sand.u32 %s161, 1
        %s593 = scalar_lea.sflag [#allocation5], %s592
        %s594 = sand.u32 %s161, 1
        %s595 = smul.addr %s594, 8
        %s596 = scalar_lea.vmem [#allocation11], %s595
        // Predicated region
        $region65: #{tpu_custom_call.1} parent=39 // pred_check
          %p597 = pneg %p171
        $region66: #{tpu_custom_call.1} parent=39 // pred_check_branch
          %599 = sbr.rel (%p597) target = $region68
        $region67: #{tpu_custom_call.1} parent=39 // pred_region
          %s600 = smul.u32 2, %s28
          %602 = vsyncadd %s593, 0
          %s603 = smul.addr %s600, 4
          %s604 = scalar_lea.hbm %s5, %s603
          %s605 = sshll.u32 %s596, 4
          %s606 = int_to_ptr.vmem [resolvable:$true] %s605
          %s607 = sshll.u32 %s604, 4
          %s608 = int_to_ptr.hbm [resolvable:$true] %s607
          %613 = dma.vmem_to_hbm [thread:$0]  %s606, 128, %s608, %s593, 64, 64, 4
        $region68: #{tpu_custom_call.1} parent=39 // pred_fallthru
          _
      $region40: #{tpu_custom_call.1} parent=5 // pred_fallthru
        _
      %p614 = scmp.le.s32.totalorder 2, %s19
      // Predicated region
      $region69: #{tpu_custom_call.1} parent=5 // pred_check
        %p615 = pneg %p614
      $region70: #{tpu_custom_call.1} parent=5 // pred_check_branch
        %617 = sbr.rel (%p615) target = $region72
      $region71: #{tpu_custom_call.1} parent=5 // pred_region
        %s618 = ssub.s32 %s19, 2
        // Predicated region
        $region73: #{tpu_custom_call.1} parent=71 // pred_check
          %p619 = pneg %p177
        $region74: #{tpu_custom_call.1} parent=71 // pred_check_branch
          %621 = sbr.rel (%p619) target = $region76
        $region75: #{tpu_custom_call.1} parent=71 // pred_region
          %s622 = sand.u32 %s162, 1
          %s623 = scalar_lea.sflag [#allocation5], %s622
          %s624 = sand.u32 %s162, 1
          %s625 = smul.addr %s624, 8
          %s626 = scalar_lea.vmem [#allocation11], %s625
          %628 = dma.done %s623, 128
        $region76: #{tpu_custom_call.1} parent=71 // pred_fallthru
          _
      $region72: #{tpu_custom_call.1} parent=5 // pred_fallthru
        _
    $region6: #{tpu_custom_call.1} parent=1 // loop_footer
      %s23 = sadd.s32 1, %s19
    $region7: #{tpu_custom_call.1} parent=1 // loop_footer_branch
      %18 = sbr.rel target = $region3
    $region8: #{tpu_custom_call.1} parent=1 // loop_exit
      _
    %629 = vsyncpa [#allocation4], 1
    %s630 = scalar_lea.sflag [#allocation4], 1
    %631 = vsyncpa %s630, 1
    %632 = vsyncpa [#allocation7], 1
    %633 = vsyncpa [#allocation10], 1
    %634 = vsyncpa [#allocation5], 1
    %s635 = scalar_lea.sflag [#allocation5], 1
    %636 = vsyncpa %s635, 1

</llo_original>
